<compile_context>
chip_gen: v5e
topology: v5e:2x2
jax: 0.10.0
libtpu: 0.0.40
codegen_flags: <defaults>
</compile_context>

<pallas_src>
import functools

import jax
import jax.numpy as jnp
from jax.experimental import pallas as pl
from jax.experimental.pallas import tpu as pltpu

P_DROP = 0.3
KEEP_P = 1.0 - P_DROP
NEG_SLOPE = 0.01                       # nn.LeakyReLU default
LANE = 128

# layer widths of MLPwithARD: IN -> 64 -> 64 -> 64 -> 32 -> 32 -> 32 -> 16 -> OUT
HIDDEN = [64, 64, 64, 32, 32, 32, 16]
N_LAYERS = 1 + len(HIDDEN)             # 8 matmuls (GaussianPriorLayer + 7 Linear)
N_DROP = N_LAYERS - 1                  # 7 MCDropout layers


def _round_up(n, m):
    return (n + m - 1) // m * m


def _mlp_ard_kernel(x_ref, w_ref, b_ref, mask_ref, o_ref):
    # x_ref    : (TB, 128)      bf16  padded input tile
    # w_ref    : (8, 128, 128)  bf16  (in, out) weights; layer 0 already carries
    #                                 the ARD weight sample, layers 1..7 already
    #                                 carry the 1/keep_p dropout scale.
    # b_ref    : (8, 128)       f32   biases (zero padded)
    # mask_ref : (TB, 128)      int32 bit i == keep-bit of dropout after layer i
    # o_ref    : (TB, 128)      f32   padded output tile
    b_all = b_ref[...]
    masks = mask_ref[...]

    h = x_ref[...]                                            # bf16 MXU operand
    for i in range(N_LAYERS):
        acc = jnp.dot(h, w_ref[i], preferred_element_type=jnp.float32)
        acc = acc + b_all[i:i + 1, :]
        if i == N_LAYERS - 1:
            o_ref[...] = acc.astype(o_ref.dtype)
        else:
            act = jnp.maximum(acc, NEG_SLOPE * acc)           # LeakyReLU (f32)
            keep = jnp.bitwise_and(masks, 1 << i) != 0        # dropout keep-mask
            act = jnp.where(keep, act, 0.0)                   # 1/keep_p is in W[i+1]
            h = act.astype(jnp.bfloat16)                      # bf16 for next dot


@functools.partial(jax.jit, static_argnames=("out_features",))
def mlp_with_ard_forward(x, w_stack, b_stack, drop_key, *, out_features):
    """MLPwithARD forward (one MC-dropout sample). x: (B, IN) f32 -> (B, OUT) f32."""
    B, in_features = x.shape
    assert in_features <= LANE, "input_size > 128 not supported by this packing"

    # Tall batch tiles (<=1024) amortize per-grid-step overhead and fill the MXU;
    # nb = cdiv(B, 1024) keeps the padding overshoot small.
    nb = max(1, pl.cdiv(B, 1024))
    tile_b = _round_up(pl.cdiv(B, nb), 8)
    b_pad = nb * tile_b

    x_p = jnp.pad(x.astype(jnp.float32),
                  ((0, b_pad - B), (0, LANE - in_features))).astype(jnp.bfloat16)

    # Packed dropout keep-mask: bit i of mask[r, c] == keep activation (r, c)
    # after layer i.  F.dropout(training=True) keeps each element w.p. 1-p.
    keep = jax.random.bernoulli(drop_key, KEEP_P, (N_DROP, b_pad, LANE))
    bit_vals = jnp.left_shift(jnp.int32(1),
                              jnp.arange(N_DROP, dtype=jnp.int32))[:, None, None]
    mask_packed = jnp.sum(keep.astype(jnp.int32) * bit_vals, axis=0).astype(jnp.int32)

    flops = nb * N_LAYERS * 2 * tile_b * LANE * LANE
    bytes_accessed = (x_p.size * 2 + mask_packed.size * 4 + w_stack.size * 2
                      + b_stack.size * 4 + b_pad * LANE * 4)

    grid_spec = pltpu.PrefetchScalarGridSpec(
        num_scalar_prefetch=0,
        grid=(nb,),
        in_specs=[
            pl.BlockSpec((tile_b, LANE), lambda i: (i, 0)),
            pl.BlockSpec((N_LAYERS, LANE, LANE), lambda i: (0, 0, 0)),  # resident
            pl.BlockSpec((N_LAYERS, LANE), lambda i: (0, 0)),           # resident
            pl.BlockSpec((tile_b, LANE), lambda i: (i, 0)),
        ],
        out_specs=pl.BlockSpec((tile_b, LANE), lambda i: (i, 0)),
    )

    out = pl.pallas_call(
        _mlp_ard_kernel,
        out_shape=jax.ShapeDtypeStruct((b_pad, LANE), jnp.float32),
        grid_spec=grid_spec,
        compiler_params=pltpu.CompilerParams(
            dimension_semantics=("parallel",)),
        cost_estimate=pl.CostEstimate(
            flops=flops, transcendentals=0, bytes_accessed=bytes_accessed),
    )(x_p, w_stack, b_stack, mask_packed)

    return out[:B, :out_features]


def init_mlp_ard_params(key, input_size, output_size):
    """Unpadded f32 parameters. Weights are stored (in, out) — transposed vs torch."""
    assert input_size <= LANE
    dims = [input_size] + HIDDEN + [output_size]
    keys = jax.random.split(key, 2 * N_LAYERS)
    ws, bs = [], []
    for i in range(N_LAYERS):
        fan_in, fan_out = dims[i], dims[i + 1]
        if i == 0:
            # torch GaussianPriorLayer inits weights_mean to zeros; use small
            # random values so the example forward is non-trivial.
            w = 0.1 * jax.random.normal(keys[2 * i], (fan_in, fan_out), jnp.float32)
        else:
            w = (jax.random.normal(keys[2 * i], (fan_in, fan_out), jnp.float32)
                 / jnp.sqrt(jnp.float32(fan_in)))
        b = 0.1 * jax.random.normal(keys[2 * i + 1], (fan_out,), jnp.float32)
        ws.append(w)
        bs.append(b)
    # alpha_i > 0 per input feature (torch stores it as a positive Parameter).
    alpha = 0.05 + 0.1 * (1.0 + jnp.arange(input_size, dtype=jnp.float32)) / input_size
    return ws, bs, alpha


def pack_params(ws, bs, alpha, ard_key):
    """Fold one ARD weight sample into layer 0 and the 1/keep_p dropout scale
    into layers 1..7, pad to a uniform (8,128,128) bf16 stack + (8,128) f32 biases."""
    # GaussianPriorLayer: weights = weights_mean + sqrt(alpha_i)[:, None] * randn.
    noise = jax.random.normal(ard_key, ws[0].shape, dtype=jnp.float32)
    w0 = ws[0] + jnp.sqrt(alpha)[:, None] * noise            # f32 sum, cast later
    w_eff = [w0] + [w / KEEP_P for w in ws[1:]]              # dropout scale folded in

    w_list, b_list = [], []
    for w, b in zip(w_eff, bs):
        fi, fo = w.shape
        w_list.append(jnp.pad(w, ((0, LANE - fi), (0, LANE - fo))))
        b_list.append(jnp.pad(b, (0, LANE - fo)))
    w_stack = jnp.stack(w_list).astype(jnp.bfloat16)          # (8, 128, 128) bf16
    b_stack = jnp.stack(b_list).astype(jnp.float32)           # (8, 128) f32
    return w_stack, b_stack


if __name__ == "__main__":
    B, IN, OUT = 8, 16, 8

    root = jax.random.PRNGKey(0)
    k_x, k_param, k_ard, k_drop = jax.random.split(root, 4)

    x = jax.random.normal(k_x, (B, IN), dtype=jnp.float32)
    ws, bs, alpha = init_mlp_ard_params(k_param, IN, OUT)
    w_stack, b_stack = pack_params(ws, bs, alpha, k_ard)      # one ARD weight sample

    y = mlp_with_ard_forward(x, w_stack, b_stack, k_drop, out_features=OUT)
    y = jax.block_until_ready(y)

    assert y.shape == (B, OUT), y.shape
    assert bool(jnp.all(jnp.isfinite(y)))
    print("KERNEL_OK")
</pallas_src>

<mosaic_0001>
module attributes {stable_mosaic.version = 11 : i64} {
  func.func @_mlp_ard_kernel(%arg0: i32, %arg1: memref<8x128xbf16, #tpu.memory_space<vmem>>, %arg2: memref<8x128x128xbf16, #tpu.memory_space<vmem>>, %arg3: memref<8x128xf32, #tpu.memory_space<vmem>>, %arg4: memref<8x128xi32, #tpu.memory_space<vmem>>, %arg5: memref<8x128xf32, #tpu.memory_space<vmem>>) attributes {dimension_semantics = [#tpu.dimension_semantics<parallel>], iteration_bounds = array<i64: 1>, scalar_prefetch = 0 : i64, scratch_operands = 0 : i64, tpu.core_type = #tpu.core_type<tc>, window_params = [{transform_indices = @transform_0, window_bounds = array<i64: 8, 128>}, {pipeline_mode = #tpu.pipeline_mode<synchronous>, transform_indices = @transform_1, window_bounds = array<i64: 8, 128, 128>}, {pipeline_mode = #tpu.pipeline_mode<synchronous>, transform_indices = @transform_2, window_bounds = array<i64: 8, 128>}, {transform_indices = @transform_3, window_bounds = array<i64: 8, 128>}, {transform_indices = @transform_4, window_bounds = array<i64: 8, 128>}]} {
    %c0 = arith.constant 0 : index
    %c0_0 = arith.constant 0 : index
    %0 = vector.load %arg3[%c0, %c0_0] : memref<8x128xf32, #tpu.memory_space<vmem>>, vector<8x128xf32>
    %c0_1 = arith.constant 0 : index
    %c0_2 = arith.constant 0 : index
    %1 = vector.load %arg4[%c0_1, %c0_2] : memref<8x128xi32, #tpu.memory_space<vmem>>, vector<8x128xi32>
    %c0_3 = arith.constant 0 : index
    %c0_4 = arith.constant 0 : index
    %2 = vector.load %arg1[%c0_3, %c0_4] : memref<8x128xbf16, #tpu.memory_space<vmem>>, vector<8x128xbf16>
    %c0_5 = arith.constant 0 : index
    %c0_6 = arith.constant 0 : index
    %c0_7 = arith.constant 0 : index
    %3 = vector.load %arg2[%c0_5, %c0_6, %c0_7] : memref<8x128x128xbf16, #tpu.memory_space<vmem>>, vector<1x128x128xbf16>
    %4 = vector.shape_cast %3 : vector<1x128x128xbf16> to vector<128x128xbf16>
    %cst = arith.constant dense<0.000000e+00> : vector<8x128xf32>
    %5 = tpu.matmul %2, %4, %cst {dimension_numbers = #tpu.dot_dimension_numbers<[1], [0], [0], [1], [0, 0, 1, 1], [], []>} : vector<8x128xbf16>, vector<128x128xbf16>, vector<8x128xf32> -> vector<8x128xf32>
    %6 = vector.extract_strided_slice %0 {offsets = [0, 0], sizes = [1, 128], strides = [1, 1]} : vector<8x128xf32> to vector<1x128xf32>
    %7 = vector.broadcast %6 : vector<1x128xf32> to vector<8x128xf32>
    %8 = arith.addf %5, %7 : vector<8x128xf32>
    %cst_8 = arith.constant 0.00999999977 : f32
    %9 = vector.broadcast %cst_8 : f32 to vector<8x128xf32>
    %10 = arith.mulf %9, %8 : vector<8x128xf32>
    %11 = arith.maximumf %8, %10 : vector<8x128xf32>
    %c1_i32 = arith.constant 1 : i32
    %12 = vector.broadcast %c1_i32 : i32 to vector<8x128xi32>
    %13 = arith.andi %1, %12 : vector<8x128xi32>
    %c0_i32 = arith.constant 0 : i32
    %14 = vector.broadcast %c0_i32 : i32 to vector<8x128xi32>
    %15 = arith.cmpi ne, %13, %14 : vector<8x128xi32>
    %cst_9 = arith.constant 0.000000e+00 : f32
    %16 = vector.broadcast %cst_9 : f32 to vector<8x128xf32>
    %17 = arith.select %15, %11, %16 : vector<8x128xi1>, vector<8x128xf32>
    %18 = arith.truncf %17 : vector<8x128xf32> to vector<8x128xbf16>
    %c1 = arith.constant 1 : index
    %c0_10 = arith.constant 0 : index
    %c0_11 = arith.constant 0 : index
    %19 = vector.load %arg2[%c1, %c0_10, %c0_11] : memref<8x128x128xbf16, #tpu.memory_space<vmem>>, vector<1x128x128xbf16>
    %20 = vector.shape_cast %19 : vector<1x128x128xbf16> to vector<128x128xbf16>
    %cst_12 = arith.constant dense<0.000000e+00> : vector<8x128xf32>
    %21 = tpu.matmul %18, %20, %cst_12 {dimension_numbers = #tpu.dot_dimension_numbers<[1], [0], [0], [1], [0, 0, 1, 1], [], []>} : vector<8x128xbf16>, vector<128x128xbf16>, vector<8x128xf32> -> vector<8x128xf32>
    %22 = vector.extract_strided_slice %0 {offsets = [1, 0], sizes = [1, 128], strides = [1, 1]} : vector<8x128xf32> to vector<1x128xf32>
    %23 = vector.broadcast %22 : vector<1x128xf32> to vector<8x128xf32>
    %24 = arith.addf %21, %23 : vector<8x128xf32>
    %cst_13 = arith.constant 0.00999999977 : f32
    %25 = vector.broadcast %cst_13 : f32 to vector<8x128xf32>
    %26 = arith.mulf %25, %24 : vector<8x128xf32>
    %27 = arith.maximumf %24, %26 : vector<8x128xf32>
    %c2_i32 = arith.constant 2 : i32
    %28 = vector.broadcast %c2_i32 : i32 to vector<8x128xi32>
    %29 = arith.andi %1, %28 : vector<8x128xi32>
    %c0_i32_14 = arith.constant 0 : i32
    %30 = vector.broadcast %c0_i32_14 : i32 to vector<8x128xi32>
    %31 = arith.cmpi ne, %29, %30 : vector<8x128xi32>
    %cst_15 = arith.constant 0.000000e+00 : f32
    %32 = vector.broadcast %cst_15 : f32 to vector<8x128xf32>
    %33 = arith.select %31, %27, %32 : vector<8x128xi1>, vector<8x128xf32>
    %34 = arith.truncf %33 : vector<8x128xf32> to vector<8x128xbf16>
    %c2 = arith.constant 2 : index
    %c0_16 = arith.constant 0 : index
    %c0_17 = arith.constant 0 : index
    %35 = vector.load %arg2[%c2, %c0_16, %c0_17] : memref<8x128x128xbf16, #tpu.memory_space<vmem>>, vector<1x128x128xbf16>
    %36 = vector.shape_cast %35 : vector<1x128x128xbf16> to vector<128x128xbf16>
    %cst_18 = arith.constant dense<0.000000e+00> : vector<8x128xf32>
    %37 = tpu.matmul %34, %36, %cst_18 {dimension_numbers = #tpu.dot_dimension_numbers<[1], [0], [0], [1], [0, 0, 1, 1], [], []>} : vector<8x128xbf16>, vector<128x128xbf16>, vector<8x128xf32> -> vector<8x128xf32>
    %38 = vector.extract_strided_slice %0 {offsets = [2, 0], sizes = [1, 128], strides = [1, 1]} : vector<8x128xf32> to vector<1x128xf32>
    %39 = vector.broadcast %38 : vector<1x128xf32> to vector<8x128xf32>
    %40 = arith.addf %37, %39 : vector<8x128xf32>
    %cst_19 = arith.constant 0.00999999977 : f32
    %41 = vector.broadcast %cst_19 : f32 to vector<8x128xf32>
    %42 = arith.mulf %41, %40 : vector<8x128xf32>
    %43 = arith.maximumf %40, %42 : vector<8x128xf32>
    %c4_i32 = arith.constant 4 : i32
    %44 = vector.broadcast %c4_i32 : i32 to vector<8x128xi32>
    %45 = arith.andi %1, %44 : vector<8x128xi32>
    %c0_i32_20 = arith.constant 0 : i32
    %46 = vector.broadcast %c0_i32_20 : i32 to vector<8x128xi32>
    %47 = arith.cmpi ne, %45, %46 : vector<8x128xi32>
    %cst_21 = arith.constant 0.000000e+00 : f32
    %48 = vector.broadcast %cst_21 : f32 to vector<8x128xf32>
    %49 = arith.select %47, %43, %48 : vector<8x128xi1>, vector<8x128xf32>
    %50 = arith.truncf %49 : vector<8x128xf32> to vector<8x128xbf16>
    %c3 = arith.constant 3 : index
    %c0_22 = arith.constant 0 : index
    %c0_23 = arith.constant 0 : index
    %51 = vector.load %arg2[%c3, %c0_22, %c0_23] : memref<8x128x128xbf16, #tpu.memory_space<vmem>>, vector<1x128x128xbf16>
    %52 = vector.shape_cast %51 : vector<1x128x128xbf16> to vector<128x128xbf16>
    %cst_24 = arith.constant dense<0.000000e+00> : vector<8x128xf32>
    %53 = tpu.matmul %50, %52, %cst_24 {dimension_numbers = #tpu.dot_dimension_numbers<[1], [0], [0], [1], [0, 0, 1, 1], [], []>} : vector<8x128xbf16>, vector<128x128xbf16>, vector<8x128xf32> -> vector<8x128xf32>
    %54 = vector.extract_strided_slice %0 {offsets = [3, 0], sizes = [1, 128], strides = [1, 1]} : vector<8x128xf32> to vector<1x128xf32>
    %55 = vector.broadcast %54 : vector<1x128xf32> to vector<8x128xf32>
    %56 = arith.addf %53, %55 : vector<8x128xf32>
    %cst_25 = arith.constant 0.00999999977 : f32
    %57 = vector.broadcast %cst_25 : f32 to vector<8x128xf32>
    %58 = arith.mulf %57, %56 : vector<8x128xf32>
    %59 = arith.maximumf %56, %58 : vector<8x128xf32>
    %c8_i32 = arith.constant 8 : i32
    %60 = vector.broadcast %c8_i32 : i32 to vector<8x128xi32>
    %61 = arith.andi %1, %60 : vector<8x128xi32>
    %c0_i32_26 = arith.constant 0 : i32
    %62 = vector.broadcast %c0_i32_26 : i32 to vector<8x128xi32>
    %63 = arith.cmpi ne, %61, %62 : vector<8x128xi32>
    %cst_27 = arith.constant 0.000000e+00 : f32
    %64 = vector.broadcast %cst_27 : f32 to vector<8x128xf32>
    %65 = arith.select %63, %59, %64 : vector<8x128xi1>, vector<8x128xf32>
    %66 = arith.truncf %65 : vector<8x128xf32> to vector<8x128xbf16>
    %c4 = arith.constant 4 : index
    %c0_28 = arith.constant 0 : index
    %c0_29 = arith.constant 0 : index
    %67 = vector.load %arg2[%c4, %c0_28, %c0_29] : memref<8x128x128xbf16, #tpu.memory_space<vmem>>, vector<1x128x128xbf16>
    %68 = vector.shape_cast %67 : vector<1x128x128xbf16> to vector<128x128xbf16>
    %cst_30 = arith.constant dense<0.000000e+00> : vector<8x128xf32>
    %69 = tpu.matmul %66, %68, %cst_30 {dimension_numbers = #tpu.dot_dimension_numbers<[1], [0], [0], [1], [0, 0, 1, 1], [], []>} : vector<8x128xbf16>, vector<128x128xbf16>, vector<8x128xf32> -> vector<8x128xf32>
    %70 = vector.extract_strided_slice %0 {offsets = [4, 0], sizes = [1, 128], strides = [1, 1]} : vector<8x128xf32> to vector<1x128xf32>
    %71 = vector.broadcast %70 : vector<1x128xf32> to vector<8x128xf32>
    %72 = arith.addf %69, %71 : vector<8x128xf32>
    %cst_31 = arith.constant 0.00999999977 : f32
    %73 = vector.broadcast %cst_31 : f32 to vector<8x128xf32>
    %74 = arith.mulf %73, %72 : vector<8x128xf32>
    %75 = arith.maximumf %72, %74 : vector<8x128xf32>
    %c16_i32 = arith.constant 16 : i32
    %76 = vector.broadcast %c16_i32 : i32 to vector<8x128xi32>
    %77 = arith.andi %1, %76 : vector<8x128xi32>
    %c0_i32_32 = arith.constant 0 : i32
    %78 = vector.broadcast %c0_i32_32 : i32 to vector<8x128xi32>
    %79 = arith.cmpi ne, %77, %78 : vector<8x128xi32>
    %cst_33 = arith.constant 0.000000e+00 : f32
    %80 = vector.broadcast %cst_33 : f32 to vector<8x128xf32>
    %81 = arith.select %79, %75, %80 : vector<8x128xi1>, vector<8x128xf32>
    %82 = arith.truncf %81 : vector<8x128xf32> to vector<8x128xbf16>
    %c5 = arith.constant 5 : index
    %c0_34 = arith.constant 0 : index
    %c0_35 = arith.constant 0 : index
    %83 = vector.load %arg2[%c5, %c0_34, %c0_35] : memref<8x128x128xbf16, #tpu.memory_space<vmem>>, vector<1x128x128xbf16>
    %84 = vector.shape_cast %83 : vector<1x128x128xbf16> to vector<128x128xbf16>
    %cst_36 = arith.constant dense<0.000000e+00> : vector<8x128xf32>
    %85 = tpu.matmul %82, %84, %cst_36 {dimension_numbers = #tpu.dot_dimension_numbers<[1], [0], [0], [1], [0, 0, 1, 1], [], []>} : vector<8x128xbf16>, vector<128x128xbf16>, vector<8x128xf32> -> vector<8x128xf32>
    %86 = vector.extract_strided_slice %0 {offsets = [5, 0], sizes = [1, 128], strides = [1, 1]} : vector<8x128xf32> to vector<1x128xf32>
    %87 = vector.broadcast %86 : vector<1x128xf32> to vector<8x128xf32>
    %88 = arith.addf %85, %87 : vector<8x128xf32>
    %cst_37 = arith.constant 0.00999999977 : f32
    %89 = vector.broadcast %cst_37 : f32 to vector<8x128xf32>
    %90 = arith.mulf %89, %88 : vector<8x128xf32>
    %91 = arith.maximumf %88, %90 : vector<8x128xf32>
    %c32_i32 = arith.constant 32 : i32
    %92 = vector.broadcast %c32_i32 : i32 to vector<8x128xi32>
    %93 = arith.andi %1, %92 : vector<8x128xi32>
    %c0_i32_38 = arith.constant 0 : i32
    %94 = vector.broadcast %c0_i32_38 : i32 to vector<8x128xi32>
    %95 = arith.cmpi ne, %93, %94 : vector<8x128xi32>
    %cst_39 = arith.constant 0.000000e+00 : f32
    %96 = vector.broadcast %cst_39 : f32 to vector<8x128xf32>
    %97 = arith.select %95, %91, %96 : vector<8x128xi1>, vector<8x128xf32>
    %98 = arith.truncf %97 : vector<8x128xf32> to vector<8x128xbf16>
    %c6 = arith.constant 6 : index
    %c0_40 = arith.constant 0 : index
    %c0_41 = arith.constant 0 : index
    %99 = vector.load %arg2[%c6, %c0_40, %c0_41] : memref<8x128x128xbf16, #tpu.memory_space<vmem>>, vector<1x128x128xbf16>
    %100 = vector.shape_cast %99 : vector<1x128x128xbf16> to vector<128x128xbf16>
    %cst_42 = arith.constant dense<0.000000e+00> : vector<8x128xf32>
    %101 = tpu.matmul %98, %100, %cst_42 {dimension_numbers = #tpu.dot_dimension_numbers<[1], [0], [0], [1], [0, 0, 1, 1], [], []>} : vector<8x128xbf16>, vector<128x128xbf16>, vector<8x128xf32> -> vector<8x128xf32>
    %102 = vector.extract_strided_slice %0 {offsets = [6, 0], sizes = [1, 128], strides = [1, 1]} : vector<8x128xf32> to vector<1x128xf32>
    %103 = vector.broadcast %102 : vector<1x128xf32> to vector<8x128xf32>
    %104 = arith.addf %101, %103 : vector<8x128xf32>
    %cst_43 = arith.constant 0.00999999977 : f32
    %105 = vector.broadcast %cst_43 : f32 to vector<8x128xf32>
    %106 = arith.mulf %105, %104 : vector<8x128xf32>
    %107 = arith.maximumf %104, %106 : vector<8x128xf32>
    %c64_i32 = arith.constant 64 : i32
    %108 = vector.broadcast %c64_i32 : i32 to vector<8x128xi32>
    %109 = arith.andi %1, %108 : vector<8x128xi32>
    %c0_i32_44 = arith.constant 0 : i32
    %110 = vector.broadcast %c0_i32_44 : i32 to vector<8x128xi32>
    %111 = arith.cmpi ne, %109, %110 : vector<8x128xi32>
    %cst_45 = arith.constant 0.000000e+00 : f32
    %112 = vector.broadcast %cst_45 : f32 to vector<8x128xf32>
    %113 = arith.select %111, %107, %112 : vector<8x128xi1>, vector<8x128xf32>
    %114 = arith.truncf %113 : vector<8x128xf32> to vector<8x128xbf16>
    %c7 = arith.constant 7 : index
    %c0_46 = arith.constant 0 : index
    %c0_47 = arith.constant 0 : index
    %115 = vector.load %arg2[%c7, %c0_46, %c0_47] : memref<8x128x128xbf16, #tpu.memory_space<vmem>>, vector<1x128x128xbf16>
    %116 = vector.shape_cast %115 : vector<1x128x128xbf16> to vector<128x128xbf16>
    %cst_48 = arith.constant dense<0.000000e+00> : vector<8x128xf32>
    %117 = tpu.matmul %114, %116, %cst_48 {dimension_numbers = #tpu.dot_dimension_numbers<[1], [0], [0], [1], [0, 0, 1, 1], [], []>} : vector<8x128xbf16>, vector<128x128xbf16>, vector<8x128xf32> -> vector<8x128xf32>
    %118 = vector.extract_strided_slice %0 {offsets = [7, 0], sizes = [1, 128], strides = [1, 1]} : vector<8x128xf32> to vector<1x128xf32>
    %119 = vector.broadcast %118 : vector<1x128xf32> to vector<8x128xf32>
    %120 = arith.addf %117, %119 : vector<8x128xf32>
    %c0_49 = arith.constant 0 : index
    %c0_50 = arith.constant 0 : index
    %121 = vector.load %arg5[%c0_49, %c0_50] : memref<8x128xf32, #tpu.memory_space<vmem>>, vector<8x128xf32>
    tpu.vector_store %arg5[%c0_49, %c0_50], %120 {strides = array<i32>} : memref<8x128xf32, #tpu.memory_space<vmem>>, vector<8x128xf32>,
    return
  }
  func.func @transform_0(%arg0: i32) -> (i32, i32) {
    %c0_i32 = arith.constant 0 : i32
    %c0_i32_0 = arith.constant 0 : i32
    return %arg0, %c0_i32 : i32, i32
  }
  func.func @transform_1(%arg0: i32) -> (i32, i32, i32) {
    %c0_i32 = arith.constant 0 : i32
    %c0_i32_0 = arith.constant 0 : i32
    %c0_i32_1 = arith.constant 0 : i32
    %c0_i32_2 = arith.constant 0 : i32
    return %c0_i32, %c0_i32_0, %c0_i32_1 : i32, i32, i32
  }
  func.func @transform_2(%arg0: i32) -> (i32, i32) {
    %c0_i32 = arith.constant 0 : i32
    %c0_i32_0 = arith.constant 0 : i32
    %c0_i32_1 = arith.constant 0 : i32
    return %c0_i32, %c0_i32_0 : i32, i32
  }
  func.func @transform_3(%arg0: i32) -> (i32, i32) {
    %c0_i32 = arith.constant 0 : i32
    %c0_i32_0 = arith.constant 0 : i32
    return %arg0, %c0_i32 : i32, i32
  }
  func.func @transform_4(%arg0: i32) -> (i32, i32) {
    %c0_i32 = arith.constant 0 : i32
    %c0_i32_0 = arith.constant 0 : i32
    return %arg0, %c0_i32 : i32, i32
  }
}

</mosaic_0001>

<llo_original>
// kernel: mlp_with_ard_forward.1
$region0: #{mlp_with_ard_forward.1}
  #allocation0 [shape = 'u32[]', space=smem, size = 0x4, offset = 0x4, fixed_abs, tag = 'smem constant byte address 0x4 - core index']
  #allocation1 [shape = 'u32[72,128]{1,0:T(1,128)}', space=vmem, size = 0x9000, scoped, tag = 'internal scratch']
  %s0 = inlined_call_operand.vmem [shape: bf16[8,128], index: 0, kind: input, shape index: {}]
  %s1 = inlined_call_operand.hbm [shape: bf16[8,128,128], index: 1, kind: input, shape index: {}]
  %s2 = inlined_call_operand.vmem [shape: f32[8,128], index: 2, kind: input, shape index: {}]
  %s3 = inlined_call_operand.vmem [shape: s32[8,128], index: 3, kind: input, shape index: {}]
  %s4 = inlined_call_operand.hbm [shape: f32[8,128], index: 4, kind: output, shape index: {}]
  %s5 = sld [smem:[#allocation0]]
  $region30: #{mlp_with_ard_forward.1} parent=0
    _
  %s7 = ssub.s32 1, %s5
  %s8 = scalar_select 0, %s7, %s5
  $region1: #{mlp_with_ard_forward.1} parent=0
    #allocation2 [shape = 'u8[262144]{0}', space=vmem, size = 0x40000, scoped, tag = 'input window, operand 1, single buffered']
    #allocation3 [shape = 's32[1]{0}', space=sflag, size = 0x4, scoped, tag = 'scoped memory for mlp_with_ard_forward.1']
    #allocation4 [shape = 's32[1]{0}', space=sflag, size = 0x4, scoped, tag = 'scoped memory for mlp_with_ard_forward.1']
    #allocation5 [shape = 'u8[4096]{0}', space=vmem, size = 0x1000, scoped, tag = 'output window, operand 0, single buffered']
    %9 = vsyncpa [#allocation3], 0
    %10 = vsyncpa [#allocation4], 0
    // Predicated region
    $region2: #{mlp_with_ard_forward.1} parent=1 // pred_check
      _
    $region3: #{mlp_with_ard_forward.1} parent=1 // pred_check_branch
      %12 = sbr.rel (0) target = $region5
    $region4: #{mlp_with_ard_forward.1} parent=1 // pred_region
      _
    $region5: #{mlp_with_ard_forward.1} parent=1 // pred_fallthru
      _
    // Predicated region
    $region6: #{mlp_with_ard_forward.1} parent=1 // pred_check
      _
    $region7: #{mlp_with_ard_forward.1} parent=1 // pred_check_branch
      %14 = sbr.rel (0) target = $region9
    $region8: #{mlp_with_ard_forward.1} parent=1 // pred_region
      %16 = vsyncadd [#allocation3], 0
      %s17 = sshll.u32 %s1, 4
      %s18 = int_to_ptr.hbm [resolvable:$true] %s17
      %s19 = sshll.u32 [#allocation2], 4
      %s20 = int_to_ptr.vmem [resolvable:$true] %s19
      %25 = dma.hbm_to_vmem [thread:$0]  %s18, 8192, %s20, [#allocation3], 64, 64, 4
    $region9: #{mlp_with_ard_forward.1} parent=1 // pred_fallthru
      _
    // Predicated region
    $region10: #{mlp_with_ard_forward.1} parent=1 // pred_check
      _
    $region11: #{mlp_with_ard_forward.1} parent=1 // pred_check_branch
      %27 = sbr.rel (0) target = $region13
    $region12: #{mlp_with_ard_forward.1} parent=1 // pred_region
      _
    $region13: #{mlp_with_ard_forward.1} parent=1 // pred_fallthru
      _
    // Predicated region
    $region14: #{mlp_with_ard_forward.1} parent=1 // pred_check
      _
    $region15: #{mlp_with_ard_forward.1} parent=1 // pred_check_branch
      %29 = sbr.rel (0) target = $region17
    $region16: #{mlp_with_ard_forward.1} parent=1 // pred_region
      _
    $region17: #{mlp_with_ard_forward.1} parent=1 // pred_fallthru
      _
    // Predicated region
    $region18: #{mlp_with_ard_forward.1} parent=1 // pred_check
      _
    $region19: #{mlp_with_ard_forward.1} parent=1 // pred_check_branch
      %31 = sbr.rel (0) target = $region21
    $region20: #{mlp_with_ard_forward.1} parent=1 // pred_region
      %33 = dma.done [#allocation3], 8192
    $region21: #{mlp_with_ard_forward.1} parent=1 // pred_fallthru
      _
    %v34 = vld [vmem:[%s2] sm:$0xff]
    %v35 = vld [vmem:[%s3] sm:$0xff]
    %v36 = vld [vmem:[%s0] sm:$0xf]
    %v37 = vld [vmem:[#allocation2] sm:$0xf]
    %v38 = vld [vmem:[#allocation2 + $0x4] sm:$0xf]
    %v39 = vld [vmem:[#allocation2 + $0x8] sm:$0xf]
    %v40 = vld [vmem:[#allocation2 + $0xc] sm:$0xf]
    %v41 = vld [vmem:[#allocation2 + $0x10] sm:$0xf]
    %v42 = vld [vmem:[#allocation2 + $0x14] sm:$0xf]
    %v43 = vld [vmem:[#allocation2 + $0x18] sm:$0xf]
    %v44 = vld [vmem:[#allocation2 + $0x1c] sm:$0xf]
    %v45 = vld [vmem:[#allocation2 + $0x20] sm:$0xf]
    %v46 = vld [vmem:[#allocation2 + $0x24] sm:$0xf]
    %v47 = vld [vmem:[#allocation2 + $0x28] sm:$0xf]
    %v48 = vld [vmem:[#allocation2 + $0x2c] sm:$0xf]
    %v49 = vld [vmem:[#allocation2 + $0x30] sm:$0xf]
    %v50 = vld [vmem:[#allocation2 + $0x34] sm:$0xf]
    %v51 = vld [vmem:[#allocation2 + $0x38] sm:$0xf]
    %v52 = vld [vmem:[#allocation2 + $0x3c] sm:$0xf]
    %v53 = vperm.slane %v34, 0
    %v70 = vunpack.c.l.b16 %v37
    %v71 = vunpack.c.l.b16 %v38
    %v72 = vunpack.c.l.b16 %v39
    %v73 = vunpack.c.l.b16 %v40
    %v74 = vunpack.c.l.b16 %v41
    %v75 = vunpack.c.l.b16 %v42
    %v76 = vunpack.c.l.b16 %v43
    %v77 = vunpack.c.l.b16 %v44
    %v78 = vunpack.c.l.b16 %v45
    %v79 = vunpack.c.l.b16 %v46
    %v80 = vunpack.c.l.b16 %v47
    %v81 = vunpack.c.l.b16 %v48
    %v82 = vunpack.c.l.b16 %v49
    %v83 = vunpack.c.l.b16 %v50
    %v84 = vunpack.c.l.b16 %v51
    %v85 = vunpack.c.l.b16 %v52
    %v86 = vpack.c.b16 %v71, %v70
    %v87 = vpack.c.b16 %v73, %v72
    %v88 = vpack.c.b16 %v75, %v74
    %v89 = vpack.c.b16 %v77, %v76
    %v90 = vpack.c.b16 %v79, %v78
    %v91 = vpack.c.b16 %v81, %v80
    %v92 = vpack.c.b16 %v83, %v82
    %v93 = vpack.c.b16 %v85, %v84
    %102 = vmatpush.bf16.msra.mxu0 %v93
    %103 = vmatpush.bf16.msra.mxu0 %v92
    %104 = vmatpush.bf16.msra.mxu0 %v91
    %105 = vmatpush.bf16.msra.mxu0 %v90
    %106 = vmatpush.bf16.msra.mxu0 %v89
    %107 = vmatpush.bf16.msra.mxu0 %v88
    %108 = vmatpush.bf16.msra.mxu0 %v87
    %109 = vmatpush.bf16.msra.mxu0 %v86
    %110 = vmatmul.bf16.gmra.mxu0 %v36
    %v111 = vpop.f32.mrf.mxu0
    %v112 = vadd.f32 %v53, %v111
    %v113 = vpop.f32.mrf.mxu0
    %114 = vdwg.mxu0
    %v115 = vmul.f32 %v112, 0.01
    %v116 = vmax.f32 %v112, %v115
    %v117 = vand.u32 %v35, 1
    %vm118 = vcmp.ne.s32.totalorder %v117, 0
    %v119 = vsel %vm118, %v116, 0.0
    %v120 = vpack.c.bf16 %v119, %v119
    %s121 = scalar_lea.vmem [#allocation2], 64
    %v122 = vld [vmem:[%s121] sm:$0xf]
    %v123 = vld [vmem:[%s121 + $0x4] sm:$0xf]
    %v124 = vld [vmem:[%s121 + $0x8] sm:$0xf]
    %v125 = vld [vmem:[%s121 + $0xc] sm:$0xf]
    %v126 = vld [vmem:[%s121 + $0x10] sm:$0xf]
    %v127 = vld [vmem:[%s121 + $0x14] sm:$0xf]
    %v128 = vld [vmem:[%s121 + $0x18] sm:$0xf]
    %v129 = vld [vmem:[%s121 + $0x1c] sm:$0xf]
    %v130 = vld [vmem:[%s121 + $0x20] sm:$0xf]
    %v131 = vld [vmem:[%s121 + $0x24] sm:$0xf]
    %v132 = vld [vmem:[%s121 + $0x28] sm:$0xf]
    %v133 = vld [vmem:[%s121 + $0x2c] sm:$0xf]
    %v134 = vld [vmem:[%s121 + $0x30] sm:$0xf]
    %v135 = vld [vmem:[%s121 + $0x34] sm:$0xf]
    %v136 = vld [vmem:[%s121 + $0x38] sm:$0xf]
    %v137 = vld [vmem:[%s121 + $0x3c] sm:$0xf]
    %v138 = vperm.slane %v34, 1
    %v155 = vunpack.c.l.b16 %v122
    %v156 = vunpack.c.l.b16 %v123
    %v157 = vunpack.c.l.b16 %v124
    %v158 = vunpack.c.l.b16 %v125
    %v159 = vunpack.c.l.b16 %v126
    %v160 = vunpack.c.l.b16 %v127
    %v161 = vunpack.c.l.b16 %v128
    %v162 = vunpack.c.l.b16 %v129
    %v163 = vunpack.c.l.b16 %v130
    %v164 = vunpack.c.l.b16 %v131
    %v165 = vunpack.c.l.b16 %v132
    %v166 = vunpack.c.l.b16 %v133
    %v167 = vunpack.c.l.b16 %v134
    %v168 = vunpack.c.l.b16 %v135
    %v169 = vunpack.c.l.b16 %v136
    %v170 = vunpack.c.l.b16 %v137
    %v171 = vpack.c.b16 %v156, %v155
    %v172 = vpack.c.b16 %v158, %v157
    %v173 = vpack.c.b16 %v160, %v159
    %v174 = vpack.c.b16 %v162, %v161
    %v175 = vpack.c.b16 %v164, %v163
    %v176 = vpack.c.b16 %v166, %v165
    %v177 = vpack.c.b16 %v168, %v167
    %v178 = vpack.c.b16 %v170, %v169
    %187 = vmatpush.bf16.msra.mxu0 %v178
    %188 = vmatpush.bf16.msra.mxu0 %v177
    %189 = vmatpush.bf16.msra.mxu0 %v176
    %190 = vmatpush.bf16.msra.mxu0 %v175
    %191 = vmatpush.bf16.msra.mxu0 %v174
    %192 = vmatpush.bf16.msra.mxu0 %v173
    %193 = vmatpush.bf16.msra.mxu0 %v172
    %194 = vmatpush.bf16.msra.mxu0 %v171
    %195 = vmatmul.bf16.gmra.mxu0 %v120
    %v196 = vpop.f32.mrf.mxu0
    %v197 = vadd.f32 %v138, %v196
    %v198 = vpop.f32.mrf.mxu0
    %199 = vdwg.mxu0
    %v200 = vmul.f32 %v197, 0.01
    %v201 = vmax.f32 %v197, %v200
    %v202 = vand.u32 %v35, 2
    %vm203 = vcmp.ne.s32.totalorder %v202, 0
    %v204 = vsel %vm203, %v201, 0.0
    %v205 = vpack.c.bf16 %v204, %v204
    %s206 = scalar_lea.vmem [#allocation2], 128
    %v207 = vld [vmem:[%s206] sm:$0xf]
    %v208 = vld [vmem:[%s206 + $0x4] sm:$0xf]
    %v209 = vld [vmem:[%s206 + $0x8] sm:$0xf]
    %v210 = vld [vmem:[%s206 + $0xc] sm:$0xf]
    %v211 = vld [vmem:[%s206 + $0x10] sm:$0xf]
    %v212 = vld [vmem:[%s206 + $0x14] sm:$0xf]
    %v213 = vld [vmem:[%s206 + $0x18] sm:$0xf]
    %v214 = vld [vmem:[%s206 + $0x1c] sm:$0xf]
    %v215 = vld [vmem:[%s206 + $0x20] sm:$0xf]
    %v216 = vld [vmem:[%s206 + $0x24] sm:$0xf]
    %v217 = vld [vmem:[%s206 + $0x28] sm:$0xf]
    %v218 = vld [vmem:[%s206 + $0x2c] sm:$0xf]
    %v219 = vld [vmem:[%s206 + $0x30] sm:$0xf]
    %v220 = vld [vmem:[%s206 + $0x34] sm:$0xf]
    %v221 = vld [vmem:[%s206 + $0x38] sm:$0xf]
    %v222 = vld [vmem:[%s206 + $0x3c] sm:$0xf]
    %v223 = vperm.slane %v34, 2
    %v240 = vunpack.c.l.b16 %v207
    %v241 = vunpack.c.l.b16 %v208
    %v242 = vunpack.c.l.b16 %v209
    %v243 = vunpack.c.l.b16 %v210
    %v244 = vunpack.c.l.b16 %v211
    %v245 = vunpack.c.l.b16 %v212
    %v246 = vunpack.c.l.b16 %v213
    %v247 = vunpack.c.l.b16 %v214
    %v248 = vunpack.c.l.b16 %v215
    %v249 = vunpack.c.l.b16 %v216
    %v250 = vunpack.c.l.b16 %v217
    %v251 = vunpack.c.l.b16 %v218
    %v252 = vunpack.c.l.b16 %v219
    %v253 = vunpack.c.l.b16 %v220
    %v254 = vunpack.c.l.b16 %v221
    %v255 = vunpack.c.l.b16 %v222
    %v256 = vpack.c.b16 %v241, %v240
    %v257 = vpack.c.b16 %v243, %v242
    %v258 = vpack.c.b16 %v245, %v244
    %v259 = vpack.c.b16 %v247, %v246
    %v260 = vpack.c.b16 %v249, %v248
    %v261 = vpack.c.b16 %v251, %v250
    %v262 = vpack.c.b16 %v253, %v252
    %v263 = vpack.c.b16 %v255, %v254
    %272 = vmatpush.bf16.msra.mxu0 %v263
    %273 = vmatpush.bf16.msra.mxu0 %v262
    %274 = vmatpush.bf16.msra.mxu0 %v261
    %275 = vmatpush.bf16.msra.mxu0 %v260
    %276 = vmatpush.bf16.msra.mxu0 %v259
    %277 = vmatpush.bf16.msra.mxu0 %v258
    %278 = vmatpush.bf16.msra.mxu0 %v257
    %279 = vmatpush.bf16.msra.mxu0 %v256
    %280 = vmatmul.bf16.gmra.mxu0 %v205
    %v281 = vpop.f32.mrf.mxu0
    %v282 = vadd.f32 %v223, %v281
    %v283 = vpop.f32.mrf.mxu0
    %284 = vdwg.mxu0
    %v285 = vmul.f32 %v282, 0.01
    %v286 = vmax.f32 %v282, %v285
    %v287 = vand.u32 %v35, 4
    %vm288 = vcmp.ne.s32.totalorder %v287, 0
    %v289 = vsel %vm288, %v286, 0.0
    %v290 = vpack.c.bf16 %v289, %v289
    %s291 = scalar_lea.vmem [#allocation2], 192
    %v292 = vld [vmem:[%s291] sm:$0xf]
    %v293 = vld [vmem:[%s291 + $0x4] sm:$0xf]
    %v294 = vld [vmem:[%s291 + $0x8] sm:$0xf]
    %v295 = vld [vmem:[%s291 + $0xc] sm:$0xf]
    %v296 = vld [vmem:[%s291 + $0x10] sm:$0xf]
    %v297 = vld [vmem:[%s291 + $0x14] sm:$0xf]
    %v298 = vld [vmem:[%s291 + $0x18] sm:$0xf]
    %v299 = vld [vmem:[%s291 + $0x1c] sm:$0xf]
    %v300 = vld [vmem:[%s291 + $0x20] sm:$0xf]
    %v301 = vld [vmem:[%s291 + $0x24] sm:$0xf]
    %v302 = vld [vmem:[%s291 + $0x28] sm:$0xf]
    %v303 = vld [vmem:[%s291 + $0x2c] sm:$0xf]
    %v304 = vld [vmem:[%s291 + $0x30] sm:$0xf]
    %v305 = vld [vmem:[%s291 + $0x34] sm:$0xf]
    %v306 = vld [vmem:[%s291 + $0x38] sm:$0xf]
    %v307 = vld [vmem:[%s291 + $0x3c] sm:$0xf]
    %v308 = vperm.slane %v34, 3
    %v325 = vunpack.c.l.b16 %v292
    %v326 = vunpack.c.l.b16 %v293
    %v327 = vunpack.c.l.b16 %v294
    %v328 = vunpack.c.l.b16 %v295
    %v329 = vunpack.c.l.b16 %v296
    %v330 = vunpack.c.l.b16 %v297
    %v331 = vunpack.c.l.b16 %v298
    %v332 = vunpack.c.l.b16 %v299
    %v333 = vunpack.c.l.b16 %v300
    %v334 = vunpack.c.l.b16 %v301
    %v335 = vunpack.c.l.b16 %v302
    %v336 = vunpack.c.l.b16 %v303
    %v337 = vunpack.c.l.b16 %v304
    %v338 = vunpack.c.l.b16 %v305
    %v339 = vunpack.c.l.b16 %v306
    %v340 = vunpack.c.l.b16 %v307
    %v341 = vpack.c.b16 %v326, %v325
    %v342 = vpack.c.b16 %v328, %v327
    %v343 = vpack.c.b16 %v330, %v329
    %v344 = vpack.c.b16 %v332, %v331
    %v345 = vpack.c.b16 %v334, %v333
    %v346 = vpack.c.b16 %v336, %v335
    %v347 = vpack.c.b16 %v338, %v337
    %v348 = vpack.c.b16 %v340, %v339
    %357 = vmatpush.bf16.msra.mxu0 %v348
    %358 = vmatpush.bf16.msra.mxu0 %v347
    %359 = vmatpush.bf16.msra.mxu0 %v346
    %360 = vmatpush.bf16.msra.mxu0 %v345
    %361 = vmatpush.bf16.msra.mxu0 %v344
    %362 = vmatpush.bf16.msra.mxu0 %v343
    %363 = vmatpush.bf16.msra.mxu0 %v342
    %364 = vmatpush.bf16.msra.mxu0 %v341
    %365 = vmatmul.bf16.gmra.mxu0 %v290
    %v366 = vpop.f32.mrf.mxu0
    %v367 = vadd.f32 %v308, %v366
    %v368 = vpop.f32.mrf.mxu0
    %369 = vdwg.mxu0
    %v370 = vmul.f32 %v367, 0.01
    %v371 = vmax.f32 %v367, %v370
    %v372 = vand.u32 %v35, 8
    %vm373 = vcmp.ne.s32.totalorder %v372, 0
    %v374 = vsel %vm373, %v371, 0.0
    %v375 = vpack.c.bf16 %v374, %v374
    %s376 = scalar_lea.vmem [#allocation2], 256
    %v377 = vld [vmem:[%s376] sm:$0xf]
    %v378 = vld [vmem:[%s376 + $0x4] sm:$0xf]
    %v379 = vld [vmem:[%s376 + $0x8] sm:$0xf]
    %v380 = vld [vmem:[%s376 + $0xc] sm:$0xf]
    %v381 = vld [vmem:[%s376 + $0x10] sm:$0xf]
    %v382 = vld [vmem:[%s376 + $0x14] sm:$0xf]
    %v383 = vld [vmem:[%s376 + $0x18] sm:$0xf]
    %v384 = vld [vmem:[%s376 + $0x1c] sm:$0xf]
    %v385 = vld [vmem:[%s376 + $0x20] sm:$0xf]
    %v386 = vld [vmem:[%s376 + $0x24] sm:$0xf]
    %v387 = vld [vmem:[%s376 + $0x28] sm:$0xf]
    %v388 = vld [vmem:[%s376 + $0x2c] sm:$0xf]
    %v389 = vld [vmem:[%s376 + $0x30] sm:$0xf]
    %v390 = vld [vmem:[%s376 + $0x34] sm:$0xf]
    %v391 = vld [vmem:[%s376 + $0x38] sm:$0xf]
    %v392 = vld [vmem:[%s376 + $0x3c] sm:$0xf]
    %v393 = vperm.slane %v34, 4
    %v410 = vunpack.c.l.b16 %v377
    %v411 = vunpack.c.l.b16 %v378
    %v412 = vunpack.c.l.b16 %v379
    %v413 = vunpack.c.l.b16 %v380
    %v414 = vunpack.c.l.b16 %v381
    %v415 = vunpack.c.l.b16 %v382
    %v416 = vunpack.c.l.b16 %v383
    %v417 = vunpack.c.l.b16 %v384
    %v418 = vunpack.c.l.b16 %v385
    %v419 = vunpack.c.l.b16 %v386
    %v420 = vunpack.c.l.b16 %v387
    %v421 = vunpack.c.l.b16 %v388
    %v422 = vunpack.c.l.b16 %v389
    %v423 = vunpack.c.l.b16 %v390
    %v424 = vunpack.c.l.b16 %v391
    %v425 = vunpack.c.l.b16 %v392
    %v426 = vpack.c.b16 %v411, %v410
    %v427 = vpack.c.b16 %v413, %v412
    %v428 = vpack.c.b16 %v415, %v414
    %v429 = vpack.c.b16 %v417, %v416
    %v430 = vpack.c.b16 %v419, %v418
    %v431 = vpack.c.b16 %v421, %v420
    %v432 = vpack.c.b16 %v423, %v422
    %v433 = vpack.c.b16 %v425, %v424
    %442 = vmatpush.bf16.msra.mxu0 %v433
    %443 = vmatpush.bf16.msra.mxu0 %v432
    %444 = vmatpush.bf16.msra.mxu0 %v431
    %445 = vmatpush.bf16.msra.mxu0 %v430
    %446 = vmatpush.bf16.msra.mxu0 %v429
    %447 = vmatpush.bf16.msra.mxu0 %v428
    %448 = vmatpush.bf16.msra.mxu0 %v427
    %449 = vmatpush.bf16.msra.mxu0 %v426
    %450 = vmatmul.bf16.gmra.mxu0 %v375
    %v451 = vpop.f32.mrf.mxu0
    %v452 = vadd.f32 %v393, %v451
    %v453 = vpop.f32.mrf.mxu0
    %454 = vdwg.mxu0
    %v455 = vmul.f32 %v452, 0.01
    %v456 = vmax.f32 %v452, %v455
    %v457 = vand.u32 %v35, 16
    %vm458 = vcmp.ne.s32.totalorder %v457, 0
    %v459 = vsel %vm458, %v456, 0.0
    %v460 = vpack.c.bf16 %v459, %v459
    %s461 = scalar_lea.vmem [#allocation2], 320
    %v462 = vld [vmem:[%s461] sm:$0xf]
    %v463 = vld [vmem:[%s461 + $0x4] sm:$0xf]
    %v464 = vld [vmem:[%s461 + $0x8] sm:$0xf]
    %v465 = vld [vmem:[%s461 + $0xc] sm:$0xf]
    %v466 = vld [vmem:[%s461 + $0x10] sm:$0xf]
    %v467 = vld [vmem:[%s461 + $0x14] sm:$0xf]
    %v468 = vld [vmem:[%s461 + $0x18] sm:$0xf]
    %v469 = vld [vmem:[%s461 + $0x1c] sm:$0xf]
    %v470 = vld [vmem:[%s461 + $0x20] sm:$0xf]
    %v471 = vld [vmem:[%s461 + $0x24] sm:$0xf]
    %v472 = vld [vmem:[%s461 + $0x28] sm:$0xf]
    %v473 = vld [vmem:[%s461 + $0x2c] sm:$0xf]
    %v474 = vld [vmem:[%s461 + $0x30] sm:$0xf]
    %v475 = vld [vmem:[%s461 + $0x34] sm:$0xf]
    %v476 = vld [vmem:[%s461 + $0x38] sm:$0xf]
    %v477 = vld [vmem:[%s461 + $0x3c] sm:$0xf]
    %v478 = vperm.slane %v34, 5
    %v495 = vunpack.c.l.b16 %v462
    %v496 = vunpack.c.l.b16 %v463
    %v497 = vunpack.c.l.b16 %v464
    %v498 = vunpack.c.l.b16 %v465
    %v499 = vunpack.c.l.b16 %v466
    %v500 = vunpack.c.l.b16 %v467
    %v501 = vunpack.c.l.b16 %v468
    %v502 = vunpack.c.l.b16 %v469
    %v503 = vunpack.c.l.b16 %v470
    %v504 = vunpack.c.l.b16 %v471
    %v505 = vunpack.c.l.b16 %v472
    %v506 = vunpack.c.l.b16 %v473
    %v507 = vunpack.c.l.b16 %v474
    %v508 = vunpack.c.l.b16 %v475
    %v509 = vunpack.c.l.b16 %v476
    %v510 = vunpack.c.l.b16 %v477
    %v511 = vpack.c.b16 %v496, %v495
    %v512 = vpack.c.b16 %v498, %v497
    %v513 = vpack.c.b16 %v500, %v499
    %v514 = vpack.c.b16 %v502, %v501
    %v515 = vpack.c.b16 %v504, %v503
    %v516 = vpack.c.b16 %v506, %v505
    %v517 = vpack.c.b16 %v508, %v507
    %v518 = vpack.c.b16 %v510, %v509
    %527 = vmatpush.bf16.msra.mxu0 %v518
    %528 = vmatpush.bf16.msra.mxu0 %v517
    %529 = vmatpush.bf16.msra.mxu0 %v516
    %530 = vmatpush.bf16.msra.mxu0 %v515
    %531 = vmatpush.bf16.msra.mxu0 %v514
    %532 = vmatpush.bf16.msra.mxu0 %v513
    %533 = vmatpush.bf16.msra.mxu0 %v512
    %534 = vmatpush.bf16.msra.mxu0 %v511
    %535 = vmatmul.bf16.gmra.mxu0 %v460
    %v536 = vpop.f32.mrf.mxu0
    %v537 = vadd.f32 %v478, %v536
    %v538 = vpop.f32.mrf.mxu0
    %539 = vdwg.mxu0
    %v540 = vmul.f32 %v537, 0.01
    %v541 = vmax.f32 %v537, %v540
    %v542 = vand.u32 %v35, 32
    %vm543 = vcmp.ne.s32.totalorder %v542, 0
    %v544 = vsel %vm543, %v541, 0.0
    %v545 = vpack.c.bf16 %v544, %v544
    %s546 = scalar_lea.vmem [#allocation2], 384
    %v547 = vld [vmem:[%s546] sm:$0xf]
    %v548 = vld [vmem:[%s546 + $0x4] sm:$0xf]
    %v549 = vld [vmem:[%s546 + $0x8] sm:$0xf]
    %v550 = vld [vmem:[%s546 + $0xc] sm:$0xf]
    %v551 = vld [vmem:[%s546 + $0x10] sm:$0xf]
    %v552 = vld [vmem:[%s546 + $0x14] sm:$0xf]
    %v553 = vld [vmem:[%s546 + $0x18] sm:$0xf]
    %v554 = vld [vmem:[%s546 + $0x1c] sm:$0xf]
    %v555 = vld [vmem:[%s546 + $0x20] sm:$0xf]
    %v556 = vld [vmem:[%s546 + $0x24] sm:$0xf]
    %v557 = vld [vmem:[%s546 + $0x28] sm:$0xf]
    %v558 = vld [vmem:[%s546 + $0x2c] sm:$0xf]
    %v559 = vld [vmem:[%s546 + $0x30] sm:$0xf]
    %v560 = vld [vmem:[%s546 + $0x34] sm:$0xf]
    %v561 = vld [vmem:[%s546 + $0x38] sm:$0xf]
    %v562 = vld [vmem:[%s546 + $0x3c] sm:$0xf]
    %v563 = vperm.slane %v34, 6
    %v580 = vunpack.c.l.b16 %v547
    %v581 = vunpack.c.l.b16 %v548
    %v582 = vunpack.c.l.b16 %v549
    %v583 = vunpack.c.l.b16 %v550
    %v584 = vunpack.c.l.b16 %v551
    %v585 = vunpack.c.l.b16 %v552
    %v586 = vunpack.c.l.b16 %v553
    %v587 = vunpack.c.l.b16 %v554
    %v588 = vunpack.c.l.b16 %v555
    %v589 = vunpack.c.l.b16 %v556
    %v590 = vunpack.c.l.b16 %v557
    %v591 = vunpack.c.l.b16 %v558
    %v592 = vunpack.c.l.b16 %v559
    %v593 = vunpack.c.l.b16 %v560
    %v594 = vunpack.c.l.b16 %v561
    %v595 = vunpack.c.l.b16 %v562
    %v596 = vpack.c.b16 %v581, %v580
    %v597 = vpack.c.b16 %v583, %v582
    %v598 = vpack.c.b16 %v585, %v584
    %v599 = vpack.c.b16 %v587, %v586
    %v600 = vpack.c.b16 %v589, %v588
    %v601 = vpack.c.b16 %v591, %v590
    %v602 = vpack.c.b16 %v593, %v592
    %v603 = vpack.c.b16 %v595, %v594
    %612 = vmatpush.bf16.msra.mxu0 %v603
    %613 = vmatpush.bf16.msra.mxu0 %v602
    %614 = vmatpush.bf16.msra.mxu0 %v601
    %615 = vmatpush.bf16.msra.mxu0 %v600
    %616 = vmatpush.bf16.msra.mxu0 %v599
    %617 = vmatpush.bf16.msra.mxu0 %v598
    %618 = vmatpush.bf16.msra.mxu0 %v597
    %619 = vmatpush.bf16.msra.mxu0 %v596
    %620 = vmatmul.bf16.gmra.mxu0 %v545
    %v621 = vpop.f32.mrf.mxu0
    %v622 = vadd.f32 %v563, %v621
    %v623 = vpop.f32.mrf.mxu0
    %624 = vdwg.mxu0
    %v625 = vmul.f32 %v622, 0.01
    %v626 = vmax.f32 %v622, %v625
    %v627 = vand.u32 %v35, 64
    %vm628 = vcmp.ne.s32.totalorder %v627, 0
    %v629 = vsel %vm628, %v626, 0.0
    %v630 = vpack.c.bf16 %v629, %v629
    %s631 = scalar_lea.vmem [#allocation2], 448
    %v632 = vld [vmem:[%s631] sm:$0xf]
    %v633 = vld [vmem:[%s631 + $0x4] sm:$0xf]
    %v634 = vld [vmem:[%s631 + $0x8] sm:$0xf]
    %v635 = vld [vmem:[%s631 + $0xc] sm:$0xf]
    %v636 = vld [vmem:[%s631 + $0x10] sm:$0xf]
    %v637 = vld [vmem:[%s631 + $0x14] sm:$0xf]
    %v638 = vld [vmem:[%s631 + $0x18] sm:$0xf]
    %v639 = vld [vmem:[%s631 + $0x1c] sm:$0xf]
    %v640 = vld [vmem:[%s631 + $0x20] sm:$0xf]
    %v641 = vld [vmem:[%s631 + $0x24] sm:$0xf]
    %v642 = vld [vmem:[%s631 + $0x28] sm:$0xf]
    %v643 = vld [vmem:[%s631 + $0x2c] sm:$0xf]
    %v644 = vld [vmem:[%s631 + $0x30] sm:$0xf]
    %v645 = vld [vmem:[%s631 + $0x34] sm:$0xf]
    %v646 = vld [vmem:[%s631 + $0x38] sm:$0xf]
    %v647 = vld [vmem:[%s631 + $0x3c] sm:$0xf]
    %v648 = vperm.slane %v34, 7
    %v665 = vunpack.c.l.b16 %v632
    %v666 = vunpack.c.l.b16 %v633
    %v667 = vunpack.c.l.b16 %v634
    %v668 = vunpack.c.l.b16 %v635
    %v669 = vunpack.c.l.b16 %v636
    %v670 = vunpack.c.l.b16 %v637
    %v671 = vunpack.c.l.b16 %v638
    %v672 = vunpack.c.l.b16 %v639
    %v673 = vunpack.c.l.b16 %v640
    %v674 = vunpack.c.l.b16 %v641
    %v675 = vunpack.c.l.b16 %v642
    %v676 = vunpack.c.l.b16 %v643
    %v677 = vunpack.c.l.b16 %v644
    %v678 = vunpack.c.l.b16 %v645
    %v679 = vunpack.c.l.b16 %v646
    %v680 = vunpack.c.l.b16 %v647
    %v681 = vpack.c.b16 %v666, %v665
    %v682 = vpack.c.b16 %v668, %v667
    %v683 = vpack.c.b16 %v670, %v669
    %v684 = vpack.c.b16 %v672, %v671
    %v685 = vpack.c.b16 %v674, %v673
    %v686 = vpack.c.b16 %v676, %v675
    %v687 = vpack.c.b16 %v678, %v677
    %v688 = vpack.c.b16 %v680, %v679
    %697 = vmatpush.bf16.msra.mxu0 %v688
    %698 = vmatpush.bf16.msra.mxu0 %v687
    %699 = vmatpush.bf16.msra.mxu0 %v686
    %700 = vmatpush.bf16.msra.mxu0 %v685
    %701 = vmatpush.bf16.msra.mxu0 %v684
    %702 = vmatpush.bf16.msra.mxu0 %v683
    %703 = vmatpush.bf16.msra.mxu0 %v682
    %704 = vmatpush.bf16.msra.mxu0 %v681
    %705 = vmatmul.bf16.gmra.mxu0 %v630
    %v706 = vpop.f32.mrf.mxu0
    %v707 = vadd.f32 %v648, %v706
    %v708 = vpop.f32.mrf.mxu0
    %709 = vdwg.mxu0
    %710 = vst [vmem:[#allocation5] sm:$0xff] %v707
    // Predicated region
    $region22: #{mlp_with_ard_forward.1} parent=1 // pred_check
      _
    $region23: #{mlp_with_ard_forward.1} parent=1 // pred_check_branch
      %712 = sbr.rel (0) target = $region25
    $region24: #{mlp_with_ard_forward.1} parent=1 // pred_region
      %714 = vsyncadd [#allocation4], 0
      %s716 = sshll.u32 [#allocation5], 4
      %s717 = int_to_ptr.vmem [resolvable:$true] %s716
      %s718 = sshll.u32 %s4, 4
      %s719 = int_to_ptr.hbm [resolvable:$true] %s718
      %721 = dma.vmem_to_hbm [thread:$0]  %s717, 128, %s719, [#allocation4]
    $region25: #{mlp_with_ard_forward.1} parent=1 // pred_fallthru
      _
    // Predicated region
    $region26: #{mlp_with_ard_forward.1} parent=1 // pred_check
      _
    $region27: #{mlp_with_ard_forward.1} parent=1 // pred_check_branch
      %723 = sbr.rel (0) target = $region29
    $region28: #{mlp_with_ard_forward.1} parent=1 // pred_region
      %725 = dma.done [#allocation4], 128
    $region29: #{mlp_with_ard_forward.1} parent=1 // pred_fallthru
      _
    %726 = vsyncpa [#allocation3], 1
    %727 = vsyncpa [#allocation4], 1

</llo_original>
